<compile_context>
chip_gen: v6e
topology: v6e:2x2x1
jax: 0.10.0
libtpu: 0.0.40
codegen_flags: <defaults>
</compile_context>

<pallas_src>
import numpy as np
import jax
import jax.numpy as jnp
from jax import lax
from jax.experimental import pallas as pl
from jax.experimental.pallas import tpu as pltpu

_DN_NT = (((1,), (0,)), ((), ()))   # A @ B
_DN_TT = (((1,), (1,)), ((), ()))   # A @ B.T
_F32 = jnp.float32

# Tri-state cache: None = untested, True = pl.Buffered(1) works, False = no.
_SINGLE_BUFFER_OK = [None]


def _round_up(v, m):
    return ((v + m - 1) // m) * m


def _round_down(v, m):
    return (v // m) * m


def _vmem_budget_bytes():
    """3/4 of per-core VMEM: ~48 MiB on v7x (64 MiB), ~96 MiB on v5e/v6e."""
    try:
        cap = int(pltpu.get_tpu_info().vmem_capacity_bytes)
    except Exception:
        cap = 64 * 1024 * 1024        # conservative (v7x-sized) fallback
    return (3 * cap) // 4


def _flop_inflation_threshold():
    """O*y_dim above which the fused path's H*/O* FLOP inflation can flip the
    kernel MXU-bound (~2 * peak FLOP/s / HBM B/s per generation)."""
    try:
        kind = jax.devices()[0].device_kind.lower()
    except Exception:
        return 512
    if "v5" in kind:
        return 480
    if "v6" in kind:
        return 1300
    return 620


# --------------------------------------------------------------------------
# Kernels
# --------------------------------------------------------------------------
def _fused_kernel(use_e):
    """All heads fused into one block-diagonal MXU matmul; reduction on MXU."""

    def kernel(*refs):
        if use_e:
            (x_ref, y_ref, wbd_ref, wx_ref, wy_ref, b_ref, sel_ref, e_ref,
             out_ref) = refs
        else:
            (x_ref, y_ref, wbd_ref, wx_ref, wy_ref, b_ref, sel_ref,
             out_ref) = refs

        x = x_ref[...]                                    # [TB, x_dim]
        y = y_ref[...]                                    # [TB, y_dim]

        # Linear part in (O, TB) orientation (lane-dense output store).
        lin = (lax.dot_general(wx_ref[...], x, _DN_TT, preferred_element_type=_F32)
               + lax.dot_general(wy_ref[...], y, _DN_TT, preferred_element_type=_F32)
               + b_ref[...])                              # [O, TB]

        # Bilinear heads: one block-diagonal matmul for all heads at once.
        t = lax.dot_general(x, wbd_ref[...], _DN_NT,
                            preferred_element_type=_F32)  # [TB, H*O*hy]
        if use_e:
            # Replicate each head's y segment O times (0/1 matmul on MXU).
            y_rep = lax.dot_general(y, e_ref[...], _DN_NT,
                                    preferred_element_type=_F32)
        else:
            # O == 1: column layout of t already matches y.
            y_rep = y.astype(_F32)
        prod = t * y_rep                                  # [TB, H*O*hy]

        # Per-output-slot reduction as a 0/1 matmul (reduction on MXU).
        xy = lax.dot_general(sel_ref[...], prod, _DN_TT,
                             preferred_element_type=_F32)  # [O, TB]

        out_ref[...] = (lin + xy).astype(out_ref.dtype)

    return kernel


def _per_head_kernel(num_heads, head_x_dim, head_y_dim, output_dim):
    """Fallback for large O*y_dim: unrolled per-head matmuls, no zero
    block-diagonal and no E-replication matmul (avoids FLOP inflation)."""
    H, hx, hy, O = num_heads, head_x_dim, head_y_dim, output_dim

    def kernel(x_ref, y_ref, w1_ref, wx_ref, wy_ref, b_ref, selh_ref, out_ref):
        x = x_ref[...]                                    # [TB, x_dim]
        y = y_ref[...]                                    # [TB, y_dim]
        acc = (lax.dot_general(wx_ref[...], x, _DN_TT, preferred_element_type=_F32)
               + lax.dot_general(wy_ref[...], y, _DN_TT, preferred_element_type=_F32)
               + b_ref[...])                              # [O, TB]
        selh = selh_ref[...]                              # [O, O*hy]
        for h in range(H):                                # static unroll, H small
            x_h = x[:, h * hx:(h + 1) * hx]               # [TB, hx]
            y_h = y[:, h * hy:(h + 1) * hy]               # [TB, hy]
            t_h = lax.dot_general(x_h, w1_ref[h], _DN_NT,
                                  preferred_element_type=_F32)   # [TB, O*hy]
            y_rep = y_h.astype(_F32)
            if O > 1:
                y_rep = jnp.concatenate([y_rep] * O, axis=1)     # [TB, O*hy]
            acc = acc + lax.dot_general(selh, t_h * y_rep, _DN_TT,
                                        preferred_element_type=_F32)
        out_ref[...] = acc.astype(out_ref.dtype)

    return kernel


# --------------------------------------------------------------------------
# One-time preparation (cache the result next to the params)
# --------------------------------------------------------------------------
def prepare_interaction_aggregation(params, x_dim, y_dim, num_heads, output_dim,
                                    dtype=None, per_head=None):
    H, O = num_heads, output_dim
    hx, hy = x_dim // H, y_dim // H
    C = H * O * hy
    if per_head is None:
        per_head = (O * y_dim) > _flop_inflation_threshold()
    act_dt = jnp.dtype(dtype) if dtype is not None else jnp.dtype(
        jnp.asarray(params["w_xy"]).dtype)

    wx = jnp.asarray(params["w_x_weight"]).astype(act_dt)          # [O, x_dim]
    wy = jnp.asarray(params["w_y_weight"]).astype(act_dt)          # [O, y_dim]
    b = (jnp.asarray(params["w_x_bias"], _F32)
         + jnp.asarray(params["w_y_bias"], _F32)).reshape(O, 1)    # [O, 1]

    prepared = dict(per_head=bool(per_head), num_heads=H, output_dim=O,
                    x_dim=x_dim, y_dim=y_dim, dtype=act_dt,
                    wx=wx, wy=wy, b=b)

    w1 = jnp.asarray(params["w_xy"], _F32).reshape(H, hx, hy * O)
    # Static 0/1 selection matrix for the per-output-slot reduction (numpy).
    sel_h = np.repeat(np.eye(O, dtype=np.float32), hy, axis=1)      # [O, O*hy]

    if per_head:
        prepared["w1"] = w1.astype(act_dt)                          # [H, hx, O*hy]
        prepared["sel_h"] = jnp.asarray(sel_h)
    else:
        # Block-diagonal [x_dim, H*O*hy] built with a single einsum.
        wbd = jnp.einsum("hac,hg->hagc", w1,
                         jnp.eye(H, dtype=_F32)).reshape(x_dim, C)
        prepared["wbd"] = wbd.astype(act_dt)
        prepared["sel"] = jnp.asarray(np.tile(sel_h, (1, H)))       # [O, C]
        if O > 1:
            # E[h*hy+k, h*O*hy + o*hy + k] = 1 : replicates y per output slot.
            e = np.zeros((y_dim, C), np.float32)
            eye_hy = np.eye(hy, dtype=np.float32)
            for h in range(H):
                for o in range(O):
                    c0 = h * hy * O + o * hy
                    e[h * hy:(h + 1) * hy, c0:c0 + hy] = eye_hy
            prepared["e"] = jnp.asarray(e).astype(act_dt)
    return prepared


# --------------------------------------------------------------------------
# Forward wrapper
# --------------------------------------------------------------------------
def interaction_aggregation(x, y, params=None, *, num_heads=None, output_dim=None,
                            prepared=None, tb=None, per_head=None, dtype=None):
    B, x_dim = x.shape
    By, y_dim = y.shape
    assert By == B and y.dtype == x.dtype
    if prepared is None:
        prepared = prepare_interaction_aggregation(
            params, x_dim, y_dim, num_heads, output_dim,
            dtype=dtype, per_head=per_head)
    H, O = prepared["num_heads"], prepared["output_dim"]
    per_head = prepared["per_head"]
    hx, hy = x_dim // H, y_dim // H
    C = H * O * hy

    # Activations are streamed in their stored dtype (no HBM re-write pass);
    # small resident weights are cast to match if necessary.
    act_dt = jnp.dtype(x.dtype)

    def _cast(a):
        return a if a.dtype == act_dt else a.astype(act_dt)

    wx, wy, b = _cast(prepared["wx"]), _cast(prepared["wy"]), prepared["b"]

    # ---------------- VMEM budget & batch-tile selection --------------------
    isz = act_dt.itemsize
    budget = _vmem_budget_bytes()
    if per_head:
        weight_elems = prepared["w1"].size + wx.size + wy.size
        sel_elems = prepared["sel_h"].size
        per_row_int = 2 * 3 * (O * hy) * 4        # f32 t/y_rep/prod, 2 heads live
    else:
        weight_elems = (prepared["wbd"].size + wx.size + wy.size
                        + (prepared["e"].size if O > 1 else 0))
        sel_elems = prepared["sel"].size
        per_row_int = 3 * C * 4                   # f32 t, y_rep, prod
    # Budget both pipeline buffers of the invariant blocks (conservative even
    # when single-buffering succeeds).
    weight_bytes = 2 * (weight_elems * isz + (sel_elems + O) * 4)
    per_row = 2 * (x_dim + y_dim) * isz + 2 * O * 4 + per_row_int
    tb_fit = max(8, int((budget - weight_bytes) // per_row))

    if tb is None:
        if B < 256 and B <= tb_fit:
            tb = B                                # single small tile
        else:
            # >= 2 balanced tiles (v7x two TensorCores), as large as VMEM allows.
            target = min(2048, _round_up(pl.cdiv(B, 2), 128)) if B >= 256 else B
            tb = max(8, min(target, tb_fit, B))
            if tb >= 128:
                tb = _round_down(tb, 128)
            elif tb < B:
                tb = max(8, _round_down(tb, 8))
    n_tiles = pl.cdiv(B, tb)

    # ---------------- specs -------------------------------------------------
    def _inv_spec(shape, single):
        idx = (lambda i, _n=len(shape): (0,) * _n)
        if single and hasattr(pl, "Buffered"):
            return pl.BlockSpec(shape, idx, pipeline_mode=pl.Buffered(1))
        return pl.BlockSpec(shape, idx)

    def _build_and_run(single_buffer):
        if per_head:
            w1 = _cast(prepared["w1"])
            selh = prepared["sel_h"]
            inputs = [x, y, w1, wx, wy, b, selh]
            in_specs = [
                pl.BlockSpec((tb, x_dim), lambda i: (i, 0)),
                pl.BlockSpec((tb, y_dim), lambda i: (i, 0)),
                _inv_spec(tuple(w1.shape), single_buffer),
                _inv_spec((O, x_dim), single_buffer),
                _inv_spec((O, y_dim), single_buffer),
                _inv_spec((O, 1), single_buffer),
                _inv_spec((O, O * hy), single_buffer),
            ]
            kernel = _per_head_kernel(H, hx, hy, O)
        else:
            wbd = _cast(prepared["wbd"])
            sel = prepared["sel"]
            inputs = [x, y, wbd, wx, wy, b, sel]
            in_specs = [
                pl.BlockSpec((tb, x_dim), lambda i: (i, 0)),
                pl.BlockSpec((tb, y_dim), lambda i: (i, 0)),
                _inv_spec((x_dim, C), single_buffer),
                _inv_spec((O, x_dim), single_buffer),
                _inv_spec((O, y_dim), single_buffer),
                _inv_spec((O, 1), single_buffer),
                _inv_spec((O, C), single_buffer),
            ]
            if O > 1:
                inputs.append(_cast(prepared["e"]))
                in_specs.append(_inv_spec((y_dim, C), single_buffer))
            kernel = _fused_kernel(O > 1)

        return pl.pallas_call(
            kernel,
            # Transposed (O, B) output: lane-dense store, no tail padding
            # (partial last block is masked on write; no batch reduction).
            out_shape=jax.ShapeDtypeStruct((O, B), _F32),
            grid_spec=pltpu.PrefetchScalarGridSpec(
                num_scalar_prefetch=0,
                grid=(n_tiles,),
                in_specs=in_specs,
                out_specs=pl.BlockSpec((O, tb), lambda i: (0, i)),
            ),
            compiler_params=pltpu.CompilerParams(
                dimension_semantics=("parallel",),
                vmem_limit_bytes=int(budget),
            ),
        )(*inputs)

    if _SINGLE_BUFFER_OK[0] is None:
        try:
            out = _build_and_run(True)
            _SINGLE_BUFFER_OK[0] = True
        except Exception:
            _SINGLE_BUFFER_OK[0] = False
            out = _build_and_run(False)
    elif _SINGLE_BUFFER_OK[0]:
        out = _build_and_run(True)
    else:
        out = _build_and_run(False)

    return out.T                                          # [B, O]


# --------------------------------------------------------------------------
# Pure-JAX reference (mirrors the PyTorch forward, including .view semantics)
# --------------------------------------------------------------------------
def reference(x, y, params, num_heads, output_dim):
    HI = lax.Precision.HIGHEST
    B, x_dim = x.shape
    _, y_dim = y.shape
    hx, hy = x_dim // num_heads, y_dim // num_heads
    O = output_dim
    out = (jnp.dot(x, params["w_x_weight"].T, precision=HI) + params["w_x_bias"]
           + jnp.dot(y, params["w_y_weight"].T, precision=HI) + params["w_y_bias"])
    head_x = x.reshape(B, num_heads, hx)
    head_y = y.reshape(B, num_heads, hy)
    w1 = params["w_xy"].reshape(num_heads, hx, -1)                   # [H, hx, hy*O]
    t = jnp.matmul(head_x[:, :, None, :], w1[None, :, :, :], precision=HI)
    xy = jnp.matmul(t.reshape(B, num_heads, O, hy), head_y[..., None],
                    precision=HI)[..., 0]
    return out + xy.sum(axis=1)


# --------------------------------------------------------------------------
if __name__ == "__main__":
    def make_params(key, x_dim, y_dim, O, H):
        hx, hy = x_dim // H, y_dim // H
        ks = jax.random.split(key, 5)
        return {
            "w_x_weight": jax.random.normal(ks[0], (O, x_dim), jnp.float32) * 0.1,
            "w_x_bias":   jax.random.normal(ks[1], (O,), jnp.float32) * 0.1,
            "w_y_weight": jax.random.normal(ks[2], (O, y_dim), jnp.float32) * 0.1,
            "w_y_bias":   jax.random.normal(ks[3], (O,), jnp.float32) * 0.1,
            "w_xy": jax.random.normal(ks[4], (H * hx * hy, O), jnp.float32)
                    * (2.0 / (H * hx * hy + O)) ** 0.5,
        }

    key = jax.random.PRNGKey(0)
    k = jax.random.split(key, 3)

    # Case 1: typical FinalMLP configuration (output_dim = 1).
    B, x_dim, y_dim, H, O = 16, 16, 16, 2, 1
    x = jax.random.normal(k[0], (B, x_dim), jnp.float32)
    y = jax.random.normal(k[1], (B, y_dim), jnp.float32)
    params = make_params(k[2], x_dim, y_dim, O, H)
    prep = prepare_interaction_aggregation(params, x_dim, y_dim, H, O)
    out = jax.block_until_ready(interaction_aggregation(x, y, prepared=prep))
    ref = reference(x, y, params, H, O)
    np.testing.assert_allclose(np.asarray(out), np.asarray(ref),
                               rtol=1e-5, atol=1e-5)

    # Case 2: multi-output heads (exercises the E-replication + selection matmuls).
    O2 = 4
    params2 = make_params(jax.random.PRNGKey(1), x_dim, y_dim, O2, H)
    prep2 = prepare_interaction_aggregation(params2, x_dim, y_dim, H, O2)
    out2 = jax.block_until_ready(interaction_aggregation(x, y, prepared=prep2))
    ref2 = reference(x, y, params2, H, O2)
    np.testing.assert_allclose(np.asarray(out2), np.asarray(ref2),
                               rtol=1e-5, atol=1e-5)

    # Case 3: per-head fallback path (auto-used when O*y_dim is large).
    prep3 = prepare_interaction_aggregation(params2, x_dim, y_dim, H, O2,
                                            per_head=True)
    out3 = jax.block_until_ready(interaction_aggregation(x, y, prepared=prep3))
    np.testing.assert_allclose(np.asarray(out3), np.asarray(ref2),
                               rtol=1e-5, atol=1e-5)

    # Case 4: multi-tile grid with an unpadded partial tail block (B=272, tb=256).
    B4, xd4, yd4, H4, O4 = 272, 32, 32, 2, 2
    k4 = jax.random.split(jax.random.PRNGKey(2), 3)
    x4 = jax.random.normal(k4[0], (B4, xd4), jnp.float32)
    y4 = jax.random.normal(k4[1], (B4, yd4), jnp.float32)
    params4 = make_params(k4[2], xd4, yd4, O4, H4)
    prep4 = prepare_interaction_aggregation(params4, xd4, yd4, H4, O4)
    out4 = jax.block_until_ready(interaction_aggregation(x4, y4, prepared=prep4))
    ref4 = reference(x4, y4, params4, H4, O4)
    np.testing.assert_allclose(np.asarray(out4), np.asarray(ref4),
                               rtol=1e-4, atol=1e-4)

    # Case 5: activations already stored in bf16 upstream (streamed as-is;
    # the wrapper never re-casts activations in HBM).
    x_bf, y_bf = x.astype(jnp.bfloat16), y.astype(jnp.bfloat16)
    prep5 = prepare_interaction_aggregation(params, x_dim, y_dim, H, O,
                                            dtype=jnp.bfloat16)
    out5 = jax.block_until_ready(interaction_aggregation(x_bf, y_bf, prepared=prep5))
    np.testing.assert_allclose(np.asarray(out5), np.asarray(ref),
                               rtol=1e-1, atol=1e-1)

    print("KERNEL_OK")
</pallas_src>

<mosaic_0001>
module attributes {stable_mosaic.version = 11 : i64} {
  func.func @kernel(%arg0: i32, %arg1: memref<16x16xf32, #tpu.memory_space<vmem>>, %arg2: memref<16x16xf32, #tpu.memory_space<vmem>>, %arg3: memref<16x16xf32, #tpu.memory_space<vmem>>, %arg4: memref<1x16xf32, #tpu.memory_space<vmem>>, %arg5: memref<1x16xf32, #tpu.memory_space<vmem>>, %arg6: memref<1x1xf32, #tpu.memory_space<vmem>>, %arg7: memref<1x16xf32, #tpu.memory_space<vmem>>, %arg8: memref<1x16xf32, #tpu.memory_space<vmem>>) attributes {dimension_semantics = [#tpu.dimension_semantics<parallel>], iteration_bounds = array<i64: 1>, scalar_prefetch = 0 : i64, scratch_operands = 0 : i64, tpu.core_type = #tpu.core_type<tc>, window_params = [{transform_indices = @transform_0, window_bounds = array<i64: 16, 16>}, {transform_indices = @transform_1, window_bounds = array<i64: 16, 16>}, {pipeline_mode = #tpu.pipeline_mode<synchronous>, transform_indices = @transform_2, window_bounds = array<i64: 16, 16>}, {pipeline_mode = #tpu.pipeline_mode<synchronous>, transform_indices = @transform_3, window_bounds = array<i64: 1, 16>}, {pipeline_mode = #tpu.pipeline_mode<synchronous>, transform_indices = @transform_4, window_bounds = array<i64: 1, 16>}, {pipeline_mode = #tpu.pipeline_mode<synchronous>, transform_indices = @transform_5, window_bounds = array<i64: 1, 1>}, {pipeline_mode = #tpu.pipeline_mode<synchronous>, transform_indices = @transform_6, window_bounds = array<i64: 1, 16>}, {transform_indices = @transform_7, window_bounds = array<i64: 1, 16>}]} {
    %c0 = arith.constant 0 : index
    %c0_0 = arith.constant 0 : index
    %0 = vector.load %arg1[%c0, %c0_0] : memref<16x16xf32, #tpu.memory_space<vmem>>, vector<16x16xf32>
    %c0_1 = arith.constant 0 : index
    %c0_2 = arith.constant 0 : index
    %1 = vector.load %arg2[%c0_1, %c0_2] : memref<16x16xf32, #tpu.memory_space<vmem>>, vector<16x16xf32>
    %c0_3 = arith.constant 0 : index
    %c0_4 = arith.constant 0 : index
    %2 = vector.load %arg4[%c0_3, %c0_4] : memref<1x16xf32, #tpu.memory_space<vmem>>, vector<1x16xf32>
    %cst = arith.constant dense<0.000000e+00> : vector<1x16xf32>
    %3 = tpu.matmul %2, %0, %cst {dimension_numbers = #tpu.dot_dimension_numbers<[1], [1], [0], [0], [0, 0, 1, 0], [], []>} : vector<1x16xf32>, vector<16x16xf32>, vector<1x16xf32> -> vector<1x16xf32>
    %c0_5 = arith.constant 0 : index
    %c0_6 = arith.constant 0 : index
    %4 = vector.load %arg5[%c0_5, %c0_6] : memref<1x16xf32, #tpu.memory_space<vmem>>, vector<1x16xf32>
    %cst_7 = arith.constant dense<0.000000e+00> : vector<1x16xf32>
    %5 = tpu.matmul %4, %1, %cst_7 {dimension_numbers = #tpu.dot_dimension_numbers<[1], [1], [0], [0], [0, 0, 1, 0], [], []>} : vector<1x16xf32>, vector<16x16xf32>, vector<1x16xf32> -> vector<1x16xf32>
    %6 = arith.addf %3, %5 : vector<1x16xf32>
    %c0_8 = arith.constant 0 : index
    %c0_9 = arith.constant 0 : index
    %7 = vector.load %arg6[%c0_8, %c0_9] : memref<1x1xf32, #tpu.memory_space<vmem>>, vector<1x1xf32>
    %8 = vector.broadcast %7 : vector<1x1xf32> to vector<1x16xf32>
    %9 = arith.addf %6, %8 : vector<1x16xf32>
    %c0_10 = arith.constant 0 : index
    %c0_11 = arith.constant 0 : index
    %10 = vector.load %arg3[%c0_10, %c0_11] : memref<16x16xf32, #tpu.memory_space<vmem>>, vector<16x16xf32>
    %cst_12 = arith.constant dense<0.000000e+00> : vector<16x16xf32>
    %11 = tpu.matmul %0, %10, %cst_12 {dimension_numbers = #tpu.dot_dimension_numbers<[1], [0], [0], [1], [0, 0, 1, 1], [], []>} : vector<16x16xf32>, vector<16x16xf32>, vector<16x16xf32> -> vector<16x16xf32>
    %12 = arith.mulf %11, %1 : vector<16x16xf32>
    %c0_13 = arith.constant 0 : index
    %c0_14 = arith.constant 0 : index
    %13 = vector.load %arg7[%c0_13, %c0_14] : memref<1x16xf32, #tpu.memory_space<vmem>>, vector<1x16xf32>
    %cst_15 = arith.constant dense<0.000000e+00> : vector<1x16xf32>
    %14 = tpu.matmul %13, %12, %cst_15 {dimension_numbers = #tpu.dot_dimension_numbers<[1], [1], [0], [0], [0, 0, 1, 0], [], []>} : vector<1x16xf32>, vector<16x16xf32>, vector<1x16xf32> -> vector<1x16xf32>
    %15 = arith.addf %9, %14 : vector<1x16xf32>
    %c0_16 = arith.constant 0 : index
    %c0_17 = arith.constant 0 : index
    %16 = vector.load %arg8[%c0_16, %c0_17] : memref<1x16xf32, #tpu.memory_space<vmem>>, vector<1x16xf32>
    tpu.vector_store %arg8[%c0_16, %c0_17], %15 {strides = array<i32>} : memref<1x16xf32, #tpu.memory_space<vmem>>, vector<1x16xf32>,
    return
  }
  func.func @transform_0(%arg0: i32) -> (i32, i32) {
    %c0_i32 = arith.constant 0 : i32
    %c0_i32_0 = arith.constant 0 : i32
    return %arg0, %c0_i32 : i32, i32
  }
  func.func @transform_1(%arg0: i32) -> (i32, i32) {
    %c0_i32 = arith.constant 0 : i32
    %c0_i32_0 = arith.constant 0 : i32
    return %arg0, %c0_i32 : i32, i32
  }
  func.func @transform_2(%arg0: i32) -> (i32, i32) {
    %c0_i32 = arith.constant 0 : i32
    %c0_i32_0 = arith.constant 0 : i32
    %c0_i32_1 = arith.constant 0 : i32
    return %c0_i32, %c0_i32_0 : i32, i32
  }
  func.func @transform_3(%arg0: i32) -> (i32, i32) {
    %c0_i32 = arith.constant 0 : i32
    %c0_i32_0 = arith.constant 0 : i32
    %c0_i32_1 = arith.constant 0 : i32
    return %c0_i32, %c0_i32_0 : i32, i32
  }
  func.func @transform_4(%arg0: i32) -> (i32, i32) {
    %c0_i32 = arith.constant 0 : i32
    %c0_i32_0 = arith.constant 0 : i32
    %c0_i32_1 = arith.constant 0 : i32
    return %c0_i32, %c0_i32_0 : i32, i32
  }
  func.func @transform_5(%arg0: i32) -> (i32, i32) {
    %c0_i32 = arith.constant 0 : i32
    %c0_i32_0 = arith.constant 0 : i32
    %c0_i32_1 = arith.constant 0 : i32
    return %c0_i32, %c0_i32_0 : i32, i32
  }
  func.func @transform_6(%arg0: i32) -> (i32, i32) {
    %c0_i32 = arith.constant 0 : i32
    %c0_i32_0 = arith.constant 0 : i32
    %c0_i32_1 = arith.constant 0 : i32
    return %c0_i32, %c0_i32_0 : i32, i32
  }
  func.func @transform_7(%arg0: i32) -> (i32, i32) {
    %c0_i32 = arith.constant 0 : i32
    %c0_i32_0 = arith.constant 0 : i32
    return %c0_i32, %arg0 : i32, i32
  }
}

module attributes {stable_mosaic.version = 11 : i64} {
  func.func @kernel(%arg0: i32, %arg1: memref<16x16xf32, #tpu.memory_space<vmem>>, %arg2: memref<16x16xf32, #tpu.memory_space<vmem>>, %arg3: memref<16x16xf32, #tpu.memory_space<vmem>>, %arg4: memref<1x16xf32, #tpu.memory_space<vmem>>, %arg5: memref<1x16xf32, #tpu.memory_space<vmem>>, %arg6: memref<1x1xf32, #tpu.memory_space<vmem>>, %arg7: memref<1x16xf32, #tpu.memory_space<vmem>>, %arg8: memref<1x16xf32, #tpu.memory_space<vmem>>) attributes {dimension_semantics = [#tpu.dimension_semantics<parallel>], iteration_bounds = array<i64: 1>, scalar_prefetch = 0 : i64, scratch_operands = 0 : i64, tpu.core_type = #tpu.core_type<tc>, window_params = [{transform_indices = @transform_0, window_bounds = array<i64: 16, 16>}, {transform_indices = @transform_1, window_bounds = array<i64: 16, 16>}, {pipeline_mode = #tpu.pipeline_mode<synchronous>, transform_indices = @transform_2, window_bounds = array<i64: 16, 16>}, {pipeline_mode = #tpu.pipeline_mode<synchronous>, transform_indices = @transform_3, window_bounds = array<i64: 1, 16>}, {pipeline_mode = #tpu.pipeline_mode<synchronous>, transform_indices = @transform_4, window_bounds = array<i64: 1, 16>}, {pipeline_mode = #tpu.pipeline_mode<synchronous>, transform_indices = @transform_5, window_bounds = array<i64: 1, 1>}, {pipeline_mode = #tpu.pipeline_mode<synchronous>, transform_indices = @transform_6, window_bounds = array<i64: 1, 16>}, {transform_indices = @transform_7, window_bounds = array<i64: 1, 16>}]} {
    %c0 = arith.constant 0 : index
    %c0_0 = arith.constant 0 : index
    %0 = vector.load %arg1[%c0, %c0_0] : memref<16x16xf32, #tpu.memory_space<vmem>>, vector<16x16xf32>
    %c0_1 = arith.constant 0 : index
    %c0_2 = arith.constant 0 : index
    %1 = vector.load %arg2[%c0_1, %c0_2] : memref<16x16xf32, #tpu.memory_space<vmem>>, vector<16x16xf32>
    %c0_3 = arith.constant 0 : index
    %c0_4 = arith.constant 0 : index
    %2 = vector.load %arg4[%c0_3, %c0_4] : memref<1x16xf32, #tpu.memory_space<vmem>>, vector<1x16xf32>
    %cst = arith.constant dense<0.000000e+00> : vector<1x16xf32>
    %3 = tpu.matmul %2, %0, %cst {dimension_numbers = #tpu.dot_dimension_numbers<[1], [1], [0], [0], [0, 0, 1, 0], [], []>} : vector<1x16xf32>, vector<16x16xf32>, vector<1x16xf32> -> vector<1x16xf32>
    %c0_5 = arith.constant 0 : index
    %c0_6 = arith.constant 0 : index
    %4 = vector.load %arg5[%c0_5, %c0_6] : memref<1x16xf32, #tpu.memory_space<vmem>>, vector<1x16xf32>
    %cst_7 = arith.constant dense<0.000000e+00> : vector<1x16xf32>
    %5 = tpu.matmul %4, %1, %cst_7 {dimension_numbers = #tpu.dot_dimension_numbers<[1], [1], [0], [0], [0, 0, 1, 0], [], []>} : vector<1x16xf32>, vector<16x16xf32>, vector<1x16xf32> -> vector<1x16xf32>
    %6 = arith.addf %3, %5 : vector<1x16xf32>
    %c0_8 = arith.constant 0 : index
    %c0_9 = arith.constant 0 : index
    %7 = vector.load %arg6[%c0_8, %c0_9] : memref<1x1xf32, #tpu.memory_space<vmem>>, vector<1x1xf32>
    %8 = vector.broadcast %7 : vector<1x1xf32> to vector<1x16xf32>
    %9 = arith.addf %6, %8 : vector<1x16xf32>
    %c0_10 = arith.constant 0 : index
    %c0_11 = arith.constant 0 : index
    %10 = vector.load %arg3[%c0_10, %c0_11] : memref<16x16xf32, #tpu.memory_space<vmem>>, vector<16x16xf32>
    %cst_12 = arith.constant dense<0.000000e+00> : vector<16x16xf32>
    %11 = tpu.matmul %0, %10, %cst_12 {dimension_numbers = #tpu.dot_dimension_numbers<[1], [0], [0], [1], [0, 0, 1, 1], [], []>} : vector<16x16xf32>, vector<16x16xf32>, vector<16x16xf32> -> vector<16x16xf32>
    %12 = arith.mulf %11, %1 : vector<16x16xf32>
    %c0_13 = arith.constant 0 : index
    %c0_14 = arith.constant 0 : index
    %13 = vector.load %arg7[%c0_13, %c0_14] : memref<1x16xf32, #tpu.memory_space<vmem>>, vector<1x16xf32>
    %cst_15 = arith.constant dense<0.000000e+00> : vector<1x16xf32>
    %14 = tpu.matmul %13, %12, %cst_15 {dimension_numbers = #tpu.dot_dimension_numbers<[1], [1], [0], [0], [0, 0, 1, 0], [], []>} : vector<1x16xf32>, vector<16x16xf32>, vector<1x16xf32> -> vector<1x16xf32>
    %15 = arith.addf %9, %14 : vector<1x16xf32>
    %c0_16 = arith.constant 0 : index
    %c0_17 = arith.constant 0 : index
    %16 = vector.load %arg8[%c0_16, %c0_17] : memref<1x16xf32, #tpu.memory_space<vmem>>, vector<1x16xf32>
    tpu.vector_store %arg8[%c0_16, %c0_17], %15 {strides = array<i32>} : memref<1x16xf32, #tpu.memory_space<vmem>>, vector<1x16xf32>,
    return
  }
  func.func @transform_0(%arg0: i32) -> (i32, i32) {
    %c0_i32 = arith.constant 0 : i32
    %c0_i32_0 = arith.constant 0 : i32
    return %arg0, %c0_i32 : i32, i32
  }
  func.func @transform_1(%arg0: i32) -> (i32, i32) {
    %c0_i32 = arith.constant 0 : i32
    %c0_i32_0 = arith.constant 0 : i32
    return %arg0, %c0_i32 : i32, i32
  }
  func.func @transform_2(%arg0: i32) -> (i32, i32) {
    %c0_i32 = arith.constant 0 : i32
    %c0_i32_0 = arith.constant 0 : i32
    %c0_i32_1 = arith.constant 0 : i32
    return %c0_i32, %c0_i32_0 : i32, i32
  }
  func.func @transform_3(%arg0: i32) -> (i32, i32) {
    %c0_i32 = arith.constant 0 : i32
    %c0_i32_0 = arith.constant 0 : i32
    %c0_i32_1 = arith.constant 0 : i32
    return %c0_i32, %c0_i32_0 : i32, i32
  }
  func.func @transform_4(%arg0: i32) -> (i32, i32) {
    %c0_i32 = arith.constant 0 : i32
    %c0_i32_0 = arith.constant 0 : i32
    %c0_i32_1 = arith.constant 0 : i32
    return %c0_i32, %c0_i32_0 : i32, i32
  }
  func.func @transform_5(%arg0: i32) -> (i32, i32) {
    %c0_i32 = arith.constant 0 : i32
    %c0_i32_0 = arith.constant 0 : i32
    %c0_i32_1 = arith.constant 0 : i32
    return %c0_i32, %c0_i32_0 : i32, i32
  }
  func.func @transform_6(%arg0: i32) -> (i32, i32) {
    %c0_i32 = arith.constant 0 : i32
    %c0_i32_0 = arith.constant 0 : i32
    %c0_i32_1 = arith.constant 0 : i32
    return %c0_i32, %c0_i32_0 : i32, i32
  }
  func.func @transform_7(%arg0: i32) -> (i32, i32) {
    %c0_i32 = arith.constant 0 : i32
    %c0_i32_0 = arith.constant 0 : i32
    return %c0_i32, %arg0 : i32, i32
  }
}

</mosaic_0001>

<llo_original>
// kernel: tpu_custom_call.1
$region0: #{tpu_custom_call.1}
  #allocation0 [shape = 'u32[]', space=smem, size = 0x4, offset = 0x4, fixed_abs, tag = 'smem constant byte address 0x4 - core index']
  #allocation1 [shape = 'u32[144,128]{1,0:T(1,128)}', space=vmem, size = 0x12000, scoped, tag = 'internal scratch']
  #allocation2 [shape = 'f32[1,1]{1,0:T(1,128)S(1)}', space=vmem, size = 0x200, scoped, tag = 'scoped memory for tpu_custom_call.1']
  %s0 = inlined_call_operand.hbm [shape: f32[16,16], index: 0, kind: input, shape index: {}]
  %s1 = inlined_call_operand.hbm [shape: f32[16,16], index: 1, kind: input, shape index: {}]
  %s2 = inlined_call_operand.hbm [shape: f32[16,16], index: 2, kind: input, shape index: {}]
  %s3 = inlined_call_operand.vmem [shape: f32[1,16], index: 3, kind: input, shape index: {}]
  %s4 = inlined_call_operand.vmem [shape: f32[1,16], index: 4, kind: input, shape index: {}]
  %s5 = inlined_call_operand.<no memory space> [shape: f32[1,1], index: 5, kind: input, shape index: {}]
  %s6 = inlined_call_operand.vmem [shape: f32[1,16], index: 6, kind: input, shape index: {}]
  %s7 = inlined_call_operand.hbm [shape: f32[1,16], index: 7, kind: output, shape index: {}]
  %s8 = sld [smem:[#allocation0]]
  $region50: #{tpu_custom_call.1} parent=0
    _
  %s10 = ssub.s32 1, %s8
  %s11 = scalar_select 0, %s10, %s8
  %v12 = vstv %s5
  %13 = vst [vmem:[#allocation2] sm:$0x1] %v12
  $region1: #{tpu_custom_call.1} parent=0
    #allocation3 [shape = 'u8[8192]{0}', space=vmem, size = 0x2000, scoped, tag = 'input window, operand 0, single buffered']
    #allocation4 [shape = 's32[1]{0}', space=sflag, size = 0x4, scoped, tag = 'scoped memory for tpu_custom_call.1']
    #allocation5 [shape = 's32[1]{0}', space=sflag, size = 0x4, scoped, tag = 'scoped memory for tpu_custom_call.1']
    #allocation6 [shape = 'u8[8192]{0}', space=vmem, size = 0x2000, scoped, tag = 'input window, operand 1, single buffered']
    #allocation7 [shape = 's32[1]{0}', space=sflag, size = 0x4, scoped, tag = 'scoped memory for tpu_custom_call.1']
    #allocation8 [shape = 'u8[8192]{0}', space=vmem, size = 0x2000, scoped, tag = 'input window, operand 2, single buffered']
    #allocation9 [shape = 'u8[512]{0}', space=vmem, size = 0x400, scoped, tag = 'output window, operand 0, single buffered']
    %14 = vsyncpa [#allocation4], 0
    %15 = vsyncpa [#allocation7], 0
    %16 = vsyncpa [#allocation5], 0
    // Predicated region
    $region2: #{tpu_custom_call.1} parent=1 // pred_check
      _
    $region3: #{tpu_custom_call.1} parent=1 // pred_check_branch
      %18 = sbr.rel (0) target = $region5
    $region4: #{tpu_custom_call.1} parent=1 // pred_region
      %s20 = ssub.s32 256, 256
      %21 = vsyncadd [#allocation4], %s20
      %s22 = sshll.u32 [#allocation3], 4
      %s23 = int_to_ptr.vmem [resolvable:$true] %s22
      %28 = dma.hbm_to_vmem [thread:$0]  %s0, 256, %s23, [#allocation4], 128, 128, 8
    $region5: #{tpu_custom_call.1} parent=1 // pred_fallthru
      _
    // Predicated region
    $region6: #{tpu_custom_call.1} parent=1 // pred_check
      _
    $region7: #{tpu_custom_call.1} parent=1 // pred_check_branch
      %30 = sbr.rel (0) target = $region9
    $region8: #{tpu_custom_call.1} parent=1 // pred_region
      %s32 = ssub.s32 256, 256
      %33 = vsyncadd [#allocation7], %s32
      %s34 = sshll.u32 [#allocation6], 4
      %s35 = int_to_ptr.vmem [resolvable:$true] %s34
      %40 = dma.hbm_to_vmem [thread:$0]  %s1, 256, %s35, [#allocation7], 128, 128, 8
    $region9: #{tpu_custom_call.1} parent=1 // pred_fallthru
      _
    // Predicated region
    $region10: #{tpu_custom_call.1} parent=1 // pred_check
      _
    $region11: #{tpu_custom_call.1} parent=1 // pred_check_branch
      %42 = sbr.rel (0) target = $region13
    $region12: #{tpu_custom_call.1} parent=1 // pred_region
      %s44 = ssub.s32 256, 256
      %45 = vsyncadd [#allocation7], %s44
      %s46 = sshll.u32 [#allocation8], 4
      %s47 = int_to_ptr.vmem [resolvable:$true] %s46
      %52 = dma.hbm_to_vmem [thread:$0]  %s2, 256, %s47, [#allocation7], 128, 128, 8
    $region13: #{tpu_custom_call.1} parent=1 // pred_fallthru
      _
    // Predicated region
    $region14: #{tpu_custom_call.1} parent=1 // pred_check
      _
    $region15: #{tpu_custom_call.1} parent=1 // pred_check_branch
      %54 = sbr.rel (0) target = $region17
    $region16: #{tpu_custom_call.1} parent=1 // pred_region
      _
    $region17: #{tpu_custom_call.1} parent=1 // pred_fallthru
      _
    // Predicated region
    $region18: #{tpu_custom_call.1} parent=1 // pred_check
      _
    $region19: #{tpu_custom_call.1} parent=1 // pred_check_branch
      %56 = sbr.rel (0) target = $region21
    $region20: #{tpu_custom_call.1} parent=1 // pred_region
      _
    $region21: #{tpu_custom_call.1} parent=1 // pred_fallthru
      _
    // Predicated region
    $region22: #{tpu_custom_call.1} parent=1 // pred_check
      _
    $region23: #{tpu_custom_call.1} parent=1 // pred_check_branch
      %58 = sbr.rel (0) target = $region25
    $region24: #{tpu_custom_call.1} parent=1 // pred_region
      _
    $region25: #{tpu_custom_call.1} parent=1 // pred_fallthru
      _
    // Predicated region
    $region26: #{tpu_custom_call.1} parent=1 // pred_check
      _
    $region27: #{tpu_custom_call.1} parent=1 // pred_check_branch
      %60 = sbr.rel (0) target = $region29
    $region28: #{tpu_custom_call.1} parent=1 // pred_region
      _
    $region29: #{tpu_custom_call.1} parent=1 // pred_fallthru
      _
    // Predicated region
    $region30: #{tpu_custom_call.1} parent=1 // pred_check
      _
    $region31: #{tpu_custom_call.1} parent=1 // pred_check_branch
      %62 = sbr.rel (0) target = $region33
    $region32: #{tpu_custom_call.1} parent=1 // pred_region
      %63 = dma.done [#allocation4], 256
    $region33: #{tpu_custom_call.1} parent=1 // pred_fallthru
      _
    // Predicated region
    $region34: #{tpu_custom_call.1} parent=1 // pred_check
      _
    $region35: #{tpu_custom_call.1} parent=1 // pred_check_branch
      %65 = sbr.rel (0) target = $region37
    $region36: #{tpu_custom_call.1} parent=1 // pred_region
      %66 = dma.done [#allocation7], 256
    $region37: #{tpu_custom_call.1} parent=1 // pred_fallthru
      _
    // Predicated region
    $region38: #{tpu_custom_call.1} parent=1 // pred_check
      _
    $region39: #{tpu_custom_call.1} parent=1 // pred_check_branch
      %68 = sbr.rel (0) target = $region41
    $region40: #{tpu_custom_call.1} parent=1 // pred_region
      %69 = dma.done [#allocation7], 256
    $region41: #{tpu_custom_call.1} parent=1 // pred_fallthru
      _
    %v70 = vld [vmem:[#allocation3] sm:$0xff]
    %v71 = vld [vmem:[#allocation3 + $0x8] sm:$0xff]
    %v72 = vld [vmem:[#allocation6] sm:$0xff]
    %v73 = vld [vmem:[#allocation6 + $0x8] sm:$0xff]
    %v74 = vld [vmem:[%s3] sm:$0x1]
    %v75 = vld [vmem:[%s4] sm:$0x1]
    %vm76 = vcmask 130048
    %v78 = vsel %vm76, %v75, 0
    %v81 = vsel %vm76, %v72, 0
    %v84 = vsel %vm76, %v73, 0
    %86 = vmatprep.subr.mxu0 0.0
    %87 = vmatpush1.xpose.msra.mxu0 0.0
    %88 = vmatprep.subr.mxu0 0.0
    %89 = vmatpush1.xpose.msra.mxu0 0.0
    %90 = vmatprep.subr.mxu0 0.0
    %91 = vmatpush1.xpose.msra.mxu0 0.0
    %92 = vmatprep.subr.mxu0 0.0
    %93 = vmatpush1.xpose.msra.mxu0 0.0
    %94 = vmatprep.subr.mxu0 0.0
    %95 = vmatpush1.xpose.msra.mxu0 0.0
    %96 = vmatprep.subr.mxu0 0.0
    %97 = vmatpush1.xpose.msra.mxu0 0.0
    %98 = vmatprep.subr.mxu0 0.0
    %99 = vmatpush1.xpose.msra.mxu0 0.0
    %100 = vmatprep.subr.mxu0 0.0
    %101 = vmatpush1.xpose.msra.mxu0 0.0
    %102 = vmatprep.subr.mxu0 0.0
    %103 = vmatpush1.xpose.msra.mxu0 0.0
    %104 = vmatprep.subr.mxu0 0.0
    %105 = vmatpush1.xpose.msra.mxu0 0.0
    %106 = vmatprep.subr.mxu0 0.0
    %107 = vmatpush1.xpose.msra.mxu0 0.0
    %108 = vmatprep.subr.mxu0 0.0
    %109 = vmatpush1.xpose.msra.mxu0 0.0
    %110 = vmatprep.subr.mxu0 0.0
    %111 = vmatpush1.xpose.msra.mxu0 0.0
    %112 = vmatprep.subr.mxu0 0.0
    %113 = vmatpush1.xpose.msra.mxu0 0.0
    %114 = vmatprep.subr.mxu0 0.0
    %115 = vmatpush1.xpose.msra.mxu0 %v84
    %116 = vmatprep.subr.mxu0 0.0
    %117 = vmatpush1.xpose.msra.mxu0 %v81
    %118 = vmatprep.subr.mxu0 0.0
    %119 = vmatpush2.xpose.msra.mxu0 0.0
    %120 = vmatprep.subr.mxu0 0.0
    %121 = vmatpush2.xpose.msra.mxu0 0.0
    %122 = vmatprep.subr.mxu0 0.0
    %123 = vmatpush2.xpose.msra.mxu0 0.0
    %124 = vmatprep.subr.mxu0 0.0
    %125 = vmatpush2.xpose.msra.mxu0 0.0
    %126 = vmatprep.subr.mxu0 0.0
    %127 = vmatpush2.xpose.msra.mxu0 0.0
    %128 = vmatprep.subr.mxu0 0.0
    %129 = vmatpush2.xpose.msra.mxu0 0.0
    %130 = vmatprep.subr.mxu0 0.0
    %131 = vmatpush2.xpose.msra.mxu0 0.0
    %132 = vmatprep.subr.mxu0 0.0
    %133 = vmatpush2.xpose.msra.mxu0 0.0
    %134 = vmatprep.subr.mxu0 0.0
    %135 = vmatpush2.xpose.msra.mxu0 0.0
    %136 = vmatprep.subr.mxu0 0.0
    %137 = vmatpush2.xpose.msra.mxu0 0.0
    %138 = vmatprep.subr.mxu0 0.0
    %139 = vmatpush2.xpose.msra.mxu0 0.0
    %140 = vmatprep.subr.mxu0 0.0
    %141 = vmatpush2.xpose.msra.mxu0 0.0
    %142 = vmatprep.subr.mxu0 0.0
    %143 = vmatpush2.xpose.msra.mxu0 0.0
    %144 = vmatprep.subr.mxu0 0.0
    %145 = vmatpush2.xpose.msra.mxu0 0.0
    %146 = vmatprep.subr.mxu0 0.0
    %147 = vmatpush2.xpose.msra.mxu0 0.0
    %148 = vmatprep.subr.mxu0 0.0
    %149 = vmatpush2.xpose.msra.mxu0 0.0
    %150 = vmatprep.mubr.f32.mxu0 0.0
    %151 = vmatmul.mubr.f32.gmra.mxu0 %v78
    %v152 = vpop.f32.mrf.mxu0
    %v153 = vadd.f32 0.0, %v152
    %v154 = vpop.f32.mrf.mxu0
    %155 = vdwg.mxu0
    %v157 = vsel %vm76, %v74, 0
    %v160 = vsel %vm76, %v70, 0
    %v163 = vsel %vm76, %v71, 0
    %165 = vmatprep.subr.mxu0 0.0
    %166 = vmatpush1.xpose.msra.mxu0 0.0
    %167 = vmatprep.subr.mxu0 0.0
    %168 = vmatpush1.xpose.msra.mxu0 0.0
    %169 = vmatprep.subr.mxu0 0.0
    %170 = vmatpush1.xpose.msra.mxu0 0.0
    %171 = vmatprep.subr.mxu0 0.0
    %172 = vmatpush1.xpose.msra.mxu0 0.0
    %173 = vmatprep.subr.mxu0 0.0
    %174 = vmatpush1.xpose.msra.mxu0 0.0
    %175 = vmatprep.subr.mxu0 0.0
    %176 = vmatpush1.xpose.msra.mxu0 0.0
    %177 = vmatprep.subr.mxu0 0.0
    %178 = vmatpush1.xpose.msra.mxu0 0.0
    %179 = vmatprep.subr.mxu0 0.0
    %180 = vmatpush1.xpose.msra.mxu0 0.0
    %181 = vmatprep.subr.mxu0 0.0
    %182 = vmatpush1.xpose.msra.mxu0 0.0
    %183 = vmatprep.subr.mxu0 0.0
    %184 = vmatpush1.xpose.msra.mxu0 0.0
    %185 = vmatprep.subr.mxu0 0.0
    %186 = vmatpush1.xpose.msra.mxu0 0.0
    %187 = vmatprep.subr.mxu0 0.0
    %188 = vmatpush1.xpose.msra.mxu0 0.0
    %189 = vmatprep.subr.mxu0 0.0
    %190 = vmatpush1.xpose.msra.mxu0 0.0
    %191 = vmatprep.subr.mxu0 0.0
    %192 = vmatpush1.xpose.msra.mxu0 0.0
    %193 = vmatprep.subr.mxu0 0.0
    %194 = vmatpush1.xpose.msra.mxu0 %v163
    %195 = vmatprep.subr.mxu0 0.0
    %196 = vmatpush1.xpose.msra.mxu0 %v160
    %197 = vmatprep.subr.mxu0 0.0
    %198 = vmatpush2.xpose.msra.mxu0 0.0
    %199 = vmatprep.subr.mxu0 0.0
    %200 = vmatpush2.xpose.msra.mxu0 0.0
    %201 = vmatprep.subr.mxu0 0.0
    %202 = vmatpush2.xpose.msra.mxu0 0.0
    %203 = vmatprep.subr.mxu0 0.0
    %204 = vmatpush2.xpose.msra.mxu0 0.0
    %205 = vmatprep.subr.mxu0 0.0
    %206 = vmatpush2.xpose.msra.mxu0 0.0
    %207 = vmatprep.subr.mxu0 0.0
    %208 = vmatpush2.xpose.msra.mxu0 0.0
    %209 = vmatprep.subr.mxu0 0.0
    %210 = vmatpush2.xpose.msra.mxu0 0.0
    %211 = vmatprep.subr.mxu0 0.0
    %212 = vmatpush2.xpose.msra.mxu0 0.0
    %213 = vmatprep.subr.mxu0 0.0
    %214 = vmatpush2.xpose.msra.mxu0 0.0
    %215 = vmatprep.subr.mxu0 0.0
    %216 = vmatpush2.xpose.msra.mxu0 0.0
    %217 = vmatprep.subr.mxu0 0.0
    %218 = vmatpush2.xpose.msra.mxu0 0.0
    %219 = vmatprep.subr.mxu0 0.0
    %220 = vmatpush2.xpose.msra.mxu0 0.0
    %221 = vmatprep.subr.mxu0 0.0
    %222 = vmatpush2.xpose.msra.mxu0 0.0
    %223 = vmatprep.subr.mxu0 0.0
    %224 = vmatpush2.xpose.msra.mxu0 0.0
    %225 = vmatprep.subr.mxu0 0.0
    %226 = vmatpush2.xpose.msra.mxu0 0.0
    %227 = vmatprep.subr.mxu0 0.0
    %228 = vmatpush2.xpose.msra.mxu0 0.0
    %229 = vmatprep.mubr.f32.mxu0 0.0
    %230 = vmatmul.mubr.f32.gmra.mxu0 %v157
    %v231 = vpop.f32.mrf.mxu0
    %v232 = vadd.f32 %v153, %v231
    %v233 = vpop.f32.mrf.mxu0
    %234 = vdwg.mxu0
    %v235 = vld [vmem:[#allocation2] sm:$0x1]
    %237 = vset.pattern.permute.xlu0 0
    %238 = vperm.xlu0 %237, %v235
    %v239 = vpop.permute.xlu0 %238
    %v241 = vlaneseq
    %v242 = vshrl.u32 %v241, 7
    %v243 = vsub.s32 0, %v242
    %v244 = vrot.slane %v239, %v243
    %v245 = vadd.f32 %v232, %v244
    %v246 = vld [vmem:[#allocation8] sm:$0xff]
    %v247 = vld [vmem:[#allocation8 + $0x8] sm:$0xff]
    %248 = vmatprep.subr.mxu0 0.0
    %249 = vmatpush1.msra.mxu0 0.0
    %250 = vmatprep.subr.mxu0 0.0
    %251 = vmatpush1.msra.mxu0 0.0
    %252 = vmatprep.subr.mxu0 0.0
    %253 = vmatpush1.msra.mxu0 0.0
    %254 = vmatprep.subr.mxu0 0.0
    %255 = vmatpush1.msra.mxu0 0.0
    %256 = vmatprep.subr.mxu0 0.0
    %257 = vmatpush1.msra.mxu0 0.0
    %258 = vmatprep.subr.mxu0 0.0
    %259 = vmatpush1.msra.mxu0 0.0
    %260 = vmatprep.subr.mxu0 0.0
    %261 = vmatpush1.msra.mxu0 0.0
    %262 = vmatprep.subr.mxu0 0.0
    %263 = vmatpush1.msra.mxu0 0.0
    %264 = vmatprep.subr.mxu0 0.0
    %265 = vmatpush1.msra.mxu0 0.0
    %266 = vmatprep.subr.mxu0 0.0
    %267 = vmatpush1.msra.mxu0 0.0
    %268 = vmatprep.subr.mxu0 0.0
    %269 = vmatpush1.msra.mxu0 0.0
    %270 = vmatprep.subr.mxu0 0.0
    %271 = vmatpush1.msra.mxu0 0.0
    %272 = vmatprep.subr.mxu0 0.0
    %273 = vmatpush1.msra.mxu0 0.0
    %274 = vmatprep.subr.mxu0 0.0
    %275 = vmatpush1.msra.mxu0 0.0
    %276 = vmatprep.subr.mxu0 0.0
    %277 = vmatpush1.msra.mxu0 %v247
    %278 = vmatprep.subr.mxu0 0.0
    %279 = vmatpush1.msra.mxu0 %v246
    %280 = vmatprep.subr.mxu0 0.0
    %281 = vmatpush2.msra.mxu0 0.0
    %282 = vmatprep.subr.mxu0 0.0
    %283 = vmatpush2.msra.mxu0 0.0
    %284 = vmatprep.subr.mxu0 0.0
    %285 = vmatpush2.msra.mxu0 0.0
    %286 = vmatprep.subr.mxu0 0.0
    %287 = vmatpush2.msra.mxu0 0.0
    %288 = vmatprep.subr.mxu0 0.0
    %289 = vmatpush2.msra.mxu0 0.0
    %290 = vmatprep.subr.mxu0 0.0
    %291 = vmatpush2.msra.mxu0 0.0
    %292 = vmatprep.subr.mxu0 0.0
    %293 = vmatpush2.msra.mxu0 0.0
    %294 = vmatprep.subr.mxu0 0.0
    %295 = vmatpush2.msra.mxu0 0.0
    %296 = vmatprep.subr.mxu0 0.0
    %297 = vmatpush2.msra.mxu0 0.0
    %298 = vmatprep.subr.mxu0 0.0
    %299 = vmatpush2.msra.mxu0 0.0
    %300 = vmatprep.subr.mxu0 0.0
    %301 = vmatpush2.msra.mxu0 0.0
    %302 = vmatprep.subr.mxu0 0.0
    %303 = vmatpush2.msra.mxu0 0.0
    %304 = vmatprep.subr.mxu0 0.0
    %305 = vmatpush2.msra.mxu0 0.0
    %306 = vmatprep.subr.mxu0 0.0
    %307 = vmatpush2.msra.mxu0 0.0
    %308 = vmatprep.subr.mxu0 0.0
    %309 = vmatpush2.msra.mxu0 0.0
    %310 = vmatprep.subr.mxu0 0.0
    %311 = vmatpush2.msra.mxu0 0.0
    %312 = vmatprep.mubr.f32.mxu0 0.0
    %313 = vmatmul.mubr.f32.gmra.mxu0 %v160
    %v314 = vpop.f32.mrf.mxu0
    %v315 = vadd.f32 0.0, %v314
    %v316 = vpop.f32.mrf.mxu0
    %317 = vmatprep.mubr.f32.mxu0 0.0
    %318 = vmatmul.mubr.f32.gmra.mxu0 %v163
    %v319 = vpop.f32.mrf.mxu0
    %v320 = vadd.f32 0.0, %v319
    %v321 = vpop.f32.mrf.mxu0
    %322 = vdwg.mxu0
    %v323 = vmul.f32 %v315, %v72
    %v324 = vmul.f32 %v320, %v73
    %v325 = vld [vmem:[%s6] sm:$0x1]
    %v327 = vsel %vm76, %v325, 0
    %v330 = vsel %vm76, %v323, 0
    %v333 = vsel %vm76, %v324, 0
    %335 = vmatprep.subr.mxu0 0.0
    %336 = vmatpush1.xpose.msra.mxu0 0.0
    %337 = vmatprep.subr.mxu0 0.0
    %338 = vmatpush1.xpose.msra.mxu0 0.0
    %339 = vmatprep.subr.mxu0 0.0
    %340 = vmatpush1.xpose.msra.mxu0 0.0
    %341 = vmatprep.subr.mxu0 0.0
    %342 = vmatpush1.xpose.msra.mxu0 0.0
    %343 = vmatprep.subr.mxu0 0.0
    %344 = vmatpush1.xpose.msra.mxu0 0.0
    %345 = vmatprep.subr.mxu0 0.0
    %346 = vmatpush1.xpose.msra.mxu0 0.0
    %347 = vmatprep.subr.mxu0 0.0
    %348 = vmatpush1.xpose.msra.mxu0 0.0
    %349 = vmatprep.subr.mxu0 0.0
    %350 = vmatpush1.xpose.msra.mxu0 0.0
    %351 = vmatprep.subr.mxu0 0.0
    %352 = vmatpush1.xpose.msra.mxu0 0.0
    %353 = vmatprep.subr.mxu0 0.0
    %354 = vmatpush1.xpose.msra.mxu0 0.0
    %355 = vmatprep.subr.mxu0 0.0
    %356 = vmatpush1.xpose.msra.mxu0 0.0
    %357 = vmatprep.subr.mxu0 0.0
    %358 = vmatpush1.xpose.msra.mxu0 0.0
    %359 = vmatprep.subr.mxu0 0.0
    %360 = vmatpush1.xpose.msra.mxu0 0.0
    %361 = vmatprep.subr.mxu0 0.0
    %362 = vmatpush1.xpose.msra.mxu0 0.0
    %363 = vmatprep.subr.mxu0 0.0
    %364 = vmatpush1.xpose.msra.mxu0 %v333
    %365 = vmatprep.subr.mxu0 0.0
    %366 = vmatpush1.xpose.msra.mxu0 %v330
    %367 = vmatprep.subr.mxu0 0.0
    %368 = vmatpush2.xpose.msra.mxu0 0.0
    %369 = vmatprep.subr.mxu0 0.0
    %370 = vmatpush2.xpose.msra.mxu0 0.0
    %371 = vmatprep.subr.mxu0 0.0
    %372 = vmatpush2.xpose.msra.mxu0 0.0
    %373 = vmatprep.subr.mxu0 0.0
    %374 = vmatpush2.xpose.msra.mxu0 0.0
    %375 = vmatprep.subr.mxu0 0.0
    %376 = vmatpush2.xpose.msra.mxu0 0.0
    %377 = vmatprep.subr.mxu0 0.0
    %378 = vmatpush2.xpose.msra.mxu0 0.0
    %379 = vmatprep.subr.mxu0 0.0
    %380 = vmatpush2.xpose.msra.mxu0 0.0
    %381 = vmatprep.subr.mxu0 0.0
    %382 = vmatpush2.xpose.msra.mxu0 0.0
    %383 = vmatprep.subr.mxu0 0.0
    %384 = vmatpush2.xpose.msra.mxu0 0.0
    %385 = vmatprep.subr.mxu0 0.0
    %386 = vmatpush2.xpose.msra.mxu0 0.0
    %387 = vmatprep.subr.mxu0 0.0
    %388 = vmatpush2.xpose.msra.mxu0 0.0
    %389 = vmatprep.subr.mxu0 0.0
    %390 = vmatpush2.xpose.msra.mxu0 0.0
    %391 = vmatprep.subr.mxu0 0.0
    %392 = vmatpush2.xpose.msra.mxu0 0.0
    %393 = vmatprep.subr.mxu0 0.0
    %394 = vmatpush2.xpose.msra.mxu0 0.0
    %395 = vmatprep.subr.mxu0 0.0
    %396 = vmatpush2.xpose.msra.mxu0 0.0
    %397 = vmatprep.subr.mxu0 0.0
    %398 = vmatpush2.xpose.msra.mxu0 0.0
    %399 = vmatprep.mubr.f32.mxu0 0.0
    %400 = vmatmul.mubr.f32.gmra.mxu0 %v327
    %v401 = vpop.f32.mrf.mxu0
    %v402 = vadd.f32 0.0, %v401
    %v403 = vpop.f32.mrf.mxu0
    %404 = vdwg.mxu0
    %v405 = vadd.f32 %v245, %v402
    %vm406 = vcmask 122880
    %407 = vst.msk [vmem:[#allocation9] sm:$0x1] %vm406, %v405
    // Predicated region
    $region42: #{tpu_custom_call.1} parent=1 // pred_check
      _
    $region43: #{tpu_custom_call.1} parent=1 // pred_check_branch
      %409 = sbr.rel (0) target = $region45
    $region44: #{tpu_custom_call.1} parent=1 // pred_region
      %s411 = ssub.s32 16, 16
      %412 = vsyncadd [#allocation5], %s411
      %s414 = sshll.u32 [#allocation9], 4
      %s415 = int_to_ptr.vmem [resolvable:$true] %s414
      %417 = dma.vmem_to_hbm [thread:$0]  %s415, 16, %s7, [#allocation5]
    $region45: #{tpu_custom_call.1} parent=1 // pred_fallthru
      _
    // Predicated region
    $region46: #{tpu_custom_call.1} parent=1 // pred_check
      _
    $region47: #{tpu_custom_call.1} parent=1 // pred_check_branch
      %419 = sbr.rel (0) target = $region49
    $region48: #{tpu_custom_call.1} parent=1 // pred_region
      %420 = dma.done [#allocation5], 16
    $region49: #{tpu_custom_call.1} parent=1 // pred_fallthru
      _
    %421 = vsyncpa [#allocation4], 1
    %422 = vsyncpa [#allocation7], 1
    %423 = vsyncpa [#allocation5], 1

// kernel: tpu_custom_call.1
$region0: #{tpu_custom_call.1}
  #allocation0 [shape = 'u32[]', space=smem, size = 0x4, offset = 0x4, fixed_abs, tag = 'smem constant byte address 0x4 - core index']
  #allocation1 [shape = 'u32[144,128]{1,0:T(1,128)}', space=vmem, size = 0x12000, scoped, tag = 'internal scratch']
  #allocation2 [shape = 'f32[1,1]{1,0:T(1,128)S(1)}', space=vmem, size = 0x200, scoped, tag = 'scoped memory for tpu_custom_call.1']
  %s0 = inlined_call_operand.hbm [shape: f32[16,16], index: 0, kind: input, shape index: {}]
  %s1 = inlined_call_operand.hbm [shape: f32[16,16], index: 1, kind: input, shape index: {}]
  %s2 = inlined_call_operand.hbm [shape: f32[16,16], index: 2, kind: input, shape index: {}]
  %s3 = inlined_call_operand.vmem [shape: f32[1,16], index: 3, kind: input, shape index: {}]
  %s4 = inlined_call_operand.vmem [shape: f32[1,16], index: 4, kind: input, shape index: {}]
  %s5 = inlined_call_operand.<no memory space> [shape: f32[1,1], index: 5, kind: input, shape index: {}]
  %s6 = inlined_call_operand.vmem [shape: f32[1,16], index: 6, kind: input, shape index: {}]
  %s7 = inlined_call_operand.hbm [shape: f32[1,16], index: 7, kind: output, shape index: {}]
  %s8 = sld [smem:[#allocation0]]
  $region50: #{tpu_custom_call.1} parent=0
    _
  %s10 = ssub.s32 1, %s8
  %s11 = scalar_select 0, %s10, %s8
  %v12 = vstv %s5
  %13 = vst [vmem:[#allocation2] sm:$0x1] %v12
  $region1: #{tpu_custom_call.1} parent=0
    #allocation3 [shape = 'u8[8192]{0}', space=vmem, size = 0x2000, scoped, tag = 'input window, operand 0, single buffered']
    #allocation4 [shape = 's32[1]{0}', space=sflag, size = 0x4, scoped, tag = 'scoped memory for tpu_custom_call.1']
    #allocation5 [shape = 's32[1]{0}', space=sflag, size = 0x4, scoped, tag = 'scoped memory for tpu_custom_call.1']
    #allocation6 [shape = 'u8[8192]{0}', space=vmem, size = 0x2000, scoped, tag = 'input window, operand 1, single buffered']
    #allocation7 [shape = 's32[1]{0}', space=sflag, size = 0x4, scoped, tag = 'scoped memory for tpu_custom_call.1']
    #allocation8 [shape = 'u8[8192]{0}', space=vmem, size = 0x2000, scoped, tag = 'input window, operand 2, single buffered']
    #allocation9 [shape = 'u8[512]{0}', space=vmem, size = 0x400, scoped, tag = 'output window, operand 0, single buffered']
    %14 = vsyncpa [#allocation4], 0
    %15 = vsyncpa [#allocation7], 0
    %16 = vsyncpa [#allocation5], 0
    // Predicated region
    $region2: #{tpu_custom_call.1} parent=1 // pred_check
      _
    $region3: #{tpu_custom_call.1} parent=1 // pred_check_branch
      %18 = sbr.rel (0) target = $region5
    $region4: #{tpu_custom_call.1} parent=1 // pred_region
      %s20 = ssub.s32 256, 256
      %21 = vsyncadd [#allocation4], %s20
      %s22 = sshll.u32 [#allocation3], 4
      %s23 = int_to_ptr.vmem [resolvable:$true] %s22
      %28 = dma.hbm_to_vmem [thread:$0]  %s0, 256, %s23, [#allocation4], 128, 128, 8
    $region5: #{tpu_custom_call.1} parent=1 // pred_fallthru
      _
    // Predicated region
    $region6: #{tpu_custom_call.1} parent=1 // pred_check
      _
    $region7: #{tpu_custom_call.1} parent=1 // pred_check_branch
      %30 = sbr.rel (0) target = $region9
    $region8: #{tpu_custom_call.1} parent=1 // pred_region
      %s32 = ssub.s32 256, 256
      %33 = vsyncadd [#allocation7], %s32
      %s34 = sshll.u32 [#allocation6], 4
      %s35 = int_to_ptr.vmem [resolvable:$true] %s34
      %40 = dma.hbm_to_vmem [thread:$0]  %s1, 256, %s35, [#allocation7], 128, 128, 8
    $region9: #{tpu_custom_call.1} parent=1 // pred_fallthru
      _
    // Predicated region
    $region10: #{tpu_custom_call.1} parent=1 // pred_check
      _
    $region11: #{tpu_custom_call.1} parent=1 // pred_check_branch
      %42 = sbr.rel (0) target = $region13
    $region12: #{tpu_custom_call.1} parent=1 // pred_region
      %s44 = ssub.s32 256, 256
      %45 = vsyncadd [#allocation7], %s44
      %s46 = sshll.u32 [#allocation8], 4
      %s47 = int_to_ptr.vmem [resolvable:$true] %s46
      %52 = dma.hbm_to_vmem [thread:$0]  %s2, 256, %s47, [#allocation7], 128, 128, 8
    $region13: #{tpu_custom_call.1} parent=1 // pred_fallthru
      _
    // Predicated region
    $region14: #{tpu_custom_call.1} parent=1 // pred_check
      _
    $region15: #{tpu_custom_call.1} parent=1 // pred_check_branch
      %54 = sbr.rel (0) target = $region17
    $region16: #{tpu_custom_call.1} parent=1 // pred_region
      _
    $region17: #{tpu_custom_call.1} parent=1 // pred_fallthru
      _
    // Predicated region
    $region18: #{tpu_custom_call.1} parent=1 // pred_check
      _
    $region19: #{tpu_custom_call.1} parent=1 // pred_check_branch
      %56 = sbr.rel (0) target = $region21
    $region20: #{tpu_custom_call.1} parent=1 // pred_region
      _
    $region21: #{tpu_custom_call.1} parent=1 // pred_fallthru
      _
    // Predicated region
    $region22: #{tpu_custom_call.1} parent=1 // pred_check
      _
    $region23: #{tpu_custom_call.1} parent=1 // pred_check_branch
      %58 = sbr.rel (0) target = $region25
    $region24: #{tpu_custom_call.1} parent=1 // pred_region
      _
    $region25: #{tpu_custom_call.1} parent=1 // pred_fallthru
      _
    // Predicated region
    $region26: #{tpu_custom_call.1} parent=1 // pred_check
      _
    $region27: #{tpu_custom_call.1} parent=1 // pred_check_branch
      %60 = sbr.rel (0) target = $region29
    $region28: #{tpu_custom_call.1} parent=1 // pred_region
      _
    $region29: #{tpu_custom_call.1} parent=1 // pred_fallthru
      _
    // Predicated region
    $region30: #{tpu_custom_call.1} parent=1 // pred_check
      _
    $region31: #{tpu_custom_call.1} parent=1 // pred_check_branch
      %62 = sbr.rel (0) target = $region33
    $region32: #{tpu_custom_call.1} parent=1 // pred_region
      %63 = dma.done [#allocation4], 256
    $region33: #{tpu_custom_call.1} parent=1 // pred_fallthru
      _
    // Predicated region
    $region34: #{tpu_custom_call.1} parent=1 // pred_check
      _
    $region35: #{tpu_custom_call.1} parent=1 // pred_check_branch
      %65 = sbr.rel (0) target = $region37
    $region36: #{tpu_custom_call.1} parent=1 // pred_region
      %66 = dma.done [#allocation7], 256
    $region37: #{tpu_custom_call.1} parent=1 // pred_fallthru
      _
    // Predicated region
    $region38: #{tpu_custom_call.1} parent=1 // pred_check
      _
    $region39: #{tpu_custom_call.1} parent=1 // pred_check_branch
      %68 = sbr.rel (0) target = $region41
    $region40: #{tpu_custom_call.1} parent=1 // pred_region
      %69 = dma.done [#allocation7], 256
    $region41: #{tpu_custom_call.1} parent=1 // pred_fallthru
      _
    %v70 = vld [vmem:[#allocation3] sm:$0xff]
    %v71 = vld [vmem:[#allocation3 + $0x8] sm:$0xff]
    %v72 = vld [vmem:[#allocation6] sm:$0xff]
    %v73 = vld [vmem:[#allocation6 + $0x8] sm:$0xff]
    %v74 = vld [vmem:[%s3] sm:$0x1]
    %v75 = vld [vmem:[%s4] sm:$0x1]
    %vm76 = vcmask 130048
    %v78 = vsel %vm76, %v75, 0
    %v81 = vsel %vm76, %v72, 0
    %v84 = vsel %vm76, %v73, 0
    %86 = vmatprep.subr.mxu0 0.0
    %87 = vmatpush1.xpose.msra.mxu0 0.0
    %88 = vmatprep.subr.mxu0 0.0
    %89 = vmatpush1.xpose.msra.mxu0 0.0
    %90 = vmatprep.subr.mxu0 0.0
    %91 = vmatpush1.xpose.msra.mxu0 0.0
    %92 = vmatprep.subr.mxu0 0.0
    %93 = vmatpush1.xpose.msra.mxu0 0.0
    %94 = vmatprep.subr.mxu0 0.0
    %95 = vmatpush1.xpose.msra.mxu0 0.0
    %96 = vmatprep.subr.mxu0 0.0
    %97 = vmatpush1.xpose.msra.mxu0 0.0
    %98 = vmatprep.subr.mxu0 0.0
    %99 = vmatpush1.xpose.msra.mxu0 0.0
    %100 = vmatprep.subr.mxu0 0.0
    %101 = vmatpush1.xpose.msra.mxu0 0.0
    %102 = vmatprep.subr.mxu0 0.0
    %103 = vmatpush1.xpose.msra.mxu0 0.0
    %104 = vmatprep.subr.mxu0 0.0
    %105 = vmatpush1.xpose.msra.mxu0 0.0
    %106 = vmatprep.subr.mxu0 0.0
    %107 = vmatpush1.xpose.msra.mxu0 0.0
    %108 = vmatprep.subr.mxu0 0.0
    %109 = vmatpush1.xpose.msra.mxu0 0.0
    %110 = vmatprep.subr.mxu0 0.0
    %111 = vmatpush1.xpose.msra.mxu0 0.0
    %112 = vmatprep.subr.mxu0 0.0
    %113 = vmatpush1.xpose.msra.mxu0 0.0
    %114 = vmatprep.subr.mxu0 0.0
    %115 = vmatpush1.xpose.msra.mxu0 %v84
    %116 = vmatprep.subr.mxu0 0.0
    %117 = vmatpush1.xpose.msra.mxu0 %v81
    %118 = vmatprep.subr.mxu0 0.0
    %119 = vmatpush2.xpose.msra.mxu0 0.0
    %120 = vmatprep.subr.mxu0 0.0
    %121 = vmatpush2.xpose.msra.mxu0 0.0
    %122 = vmatprep.subr.mxu0 0.0
    %123 = vmatpush2.xpose.msra.mxu0 0.0
    %124 = vmatprep.subr.mxu0 0.0
    %125 = vmatpush2.xpose.msra.mxu0 0.0
    %126 = vmatprep.subr.mxu0 0.0
    %127 = vmatpush2.xpose.msra.mxu0 0.0
    %128 = vmatprep.subr.mxu0 0.0
    %129 = vmatpush2.xpose.msra.mxu0 0.0
    %130 = vmatprep.subr.mxu0 0.0
    %131 = vmatpush2.xpose.msra.mxu0 0.0
    %132 = vmatprep.subr.mxu0 0.0
    %133 = vmatpush2.xpose.msra.mxu0 0.0
    %134 = vmatprep.subr.mxu0 0.0
    %135 = vmatpush2.xpose.msra.mxu0 0.0
    %136 = vmatprep.subr.mxu0 0.0
    %137 = vmatpush2.xpose.msra.mxu0 0.0
    %138 = vmatprep.subr.mxu0 0.0
    %139 = vmatpush2.xpose.msra.mxu0 0.0
    %140 = vmatprep.subr.mxu0 0.0
    %141 = vmatpush2.xpose.msra.mxu0 0.0
    %142 = vmatprep.subr.mxu0 0.0
    %143 = vmatpush2.xpose.msra.mxu0 0.0
    %144 = vmatprep.subr.mxu0 0.0
    %145 = vmatpush2.xpose.msra.mxu0 0.0
    %146 = vmatprep.subr.mxu0 0.0
    %147 = vmatpush2.xpose.msra.mxu0 0.0
    %148 = vmatprep.subr.mxu0 0.0
    %149 = vmatpush2.xpose.msra.mxu0 0.0
    %150 = vmatprep.mubr.f32.mxu0 0.0
    %151 = vmatmul.mubr.f32.gmra.mxu0 %v78
    %v152 = vpop.f32.mrf.mxu0
    %v153 = vadd.f32 0.0, %v152
    %v154 = vpop.f32.mrf.mxu0
    %155 = vdwg.mxu0
    %v157 = vsel %vm76, %v74, 0
    %v160 = vsel %vm76, %v70, 0
    %v163 = vsel %vm76, %v71, 0
    %165 = vmatprep.subr.mxu0 0.0
    %166 = vmatpush1.xpose.msra.mxu0 0.0
    %167 = vmatprep.subr.mxu0 0.0
    %168 = vmatpush1.xpose.msra.mxu0 0.0
    %169 = vmatprep.subr.mxu0 0.0
    %170 = vmatpush1.xpose.msra.mxu0 0.0
    %171 = vmatprep.subr.mxu0 0.0
    %172 = vmatpush1.xpose.msra.mxu0 0.0
    %173 = vmatprep.subr.mxu0 0.0
    %174 = vmatpush1.xpose.msra.mxu0 0.0
    %175 = vmatprep.subr.mxu0 0.0
    %176 = vmatpush1.xpose.msra.mxu0 0.0
    %177 = vmatprep.subr.mxu0 0.0
    %178 = vmatpush1.xpose.msra.mxu0 0.0
    %179 = vmatprep.subr.mxu0 0.0
    %180 = vmatpush1.xpose.msra.mxu0 0.0
    %181 = vmatprep.subr.mxu0 0.0
    %182 = vmatpush1.xpose.msra.mxu0 0.0
    %183 = vmatprep.subr.mxu0 0.0
    %184 = vmatpush1.xpose.msra.mxu0 0.0
    %185 = vmatprep.subr.mxu0 0.0
    %186 = vmatpush1.xpose.msra.mxu0 0.0
    %187 = vmatprep.subr.mxu0 0.0
    %188 = vmatpush1.xpose.msra.mxu0 0.0
    %189 = vmatprep.subr.mxu0 0.0
    %190 = vmatpush1.xpose.msra.mxu0 0.0
    %191 = vmatprep.subr.mxu0 0.0
    %192 = vmatpush1.xpose.msra.mxu0 0.0
    %193 = vmatprep.subr.mxu0 0.0
    %194 = vmatpush1.xpose.msra.mxu0 %v163
    %195 = vmatprep.subr.mxu0 0.0
    %196 = vmatpush1.xpose.msra.mxu0 %v160
    %197 = vmatprep.subr.mxu0 0.0
    %198 = vmatpush2.xpose.msra.mxu0 0.0
    %199 = vmatprep.subr.mxu0 0.0
    %200 = vmatpush2.xpose.msra.mxu0 0.0
    %201 = vmatprep.subr.mxu0 0.0
    %202 = vmatpush2.xpose.msra.mxu0 0.0
    %203 = vmatprep.subr.mxu0 0.0
    %204 = vmatpush2.xpose.msra.mxu0 0.0
    %205 = vmatprep.subr.mxu0 0.0
    %206 = vmatpush2.xpose.msra.mxu0 0.0
    %207 = vmatprep.subr.mxu0 0.0
    %208 = vmatpush2.xpose.msra.mxu0 0.0
    %209 = vmatprep.subr.mxu0 0.0
    %210 = vmatpush2.xpose.msra.mxu0 0.0
    %211 = vmatprep.subr.mxu0 0.0
    %212 = vmatpush2.xpose.msra.mxu0 0.0
    %213 = vmatprep.subr.mxu0 0.0
    %214 = vmatpush2.xpose.msra.mxu0 0.0
    %215 = vmatprep.subr.mxu0 0.0
    %216 = vmatpush2.xpose.msra.mxu0 0.0
    %217 = vmatprep.subr.mxu0 0.0
    %218 = vmatpush2.xpose.msra.mxu0 0.0
    %219 = vmatprep.subr.mxu0 0.0
    %220 = vmatpush2.xpose.msra.mxu0 0.0
    %221 = vmatprep.subr.mxu0 0.0
    %222 = vmatpush2.xpose.msra.mxu0 0.0
    %223 = vmatprep.subr.mxu0 0.0
    %224 = vmatpush2.xpose.msra.mxu0 0.0
    %225 = vmatprep.subr.mxu0 0.0
    %226 = vmatpush2.xpose.msra.mxu0 0.0
    %227 = vmatprep.subr.mxu0 0.0
    %228 = vmatpush2.xpose.msra.mxu0 0.0
    %229 = vmatprep.mubr.f32.mxu0 0.0
    %230 = vmatmul.mubr.f32.gmra.mxu0 %v157
    %v231 = vpop.f32.mrf.mxu0
    %v232 = vadd.f32 %v153, %v231
    %v233 = vpop.f32.mrf.mxu0
    %234 = vdwg.mxu0
    %v235 = vld [vmem:[#allocation2] sm:$0x1]
    %237 = vset.pattern.permute.xlu0 0
    %238 = vperm.xlu0 %237, %v235
    %v239 = vpop.permute.xlu0 %238
    %v241 = vlaneseq
    %v242 = vshrl.u32 %v241, 7
    %v243 = vsub.s32 0, %v242
    %v244 = vrot.slane %v239, %v243
    %v245 = vadd.f32 %v232, %v244
    %v246 = vld [vmem:[#allocation8] sm:$0xff]
    %v247 = vld [vmem:[#allocation8 + $0x8] sm:$0xff]
    %248 = vmatprep.subr.mxu0 0.0
    %249 = vmatpush1.msra.mxu0 0.0
    %250 = vmatprep.subr.mxu0 0.0
    %251 = vmatpush1.msra.mxu0 0.0
    %252 = vmatprep.subr.mxu0 0.0
    %253 = vmatpush1.msra.mxu0 0.0
    %254 = vmatprep.subr.mxu0 0.0
    %255 = vmatpush1.msra.mxu0 0.0
    %256 = vmatprep.subr.mxu0 0.0
    %257 = vmatpush1.msra.mxu0 0.0
    %258 = vmatprep.subr.mxu0 0.0
    %259 = vmatpush1.msra.mxu0 0.0
    %260 = vmatprep.subr.mxu0 0.0
    %261 = vmatpush1.msra.mxu0 0.0
    %262 = vmatprep.subr.mxu0 0.0
    %263 = vmatpush1.msra.mxu0 0.0
    %264 = vmatprep.subr.mxu0 0.0
    %265 = vmatpush1.msra.mxu0 0.0
    %266 = vmatprep.subr.mxu0 0.0
    %267 = vmatpush1.msra.mxu0 0.0
    %268 = vmatprep.subr.mxu0 0.0
    %269 = vmatpush1.msra.mxu0 0.0
    %270 = vmatprep.subr.mxu0 0.0
    %271 = vmatpush1.msra.mxu0 0.0
    %272 = vmatprep.subr.mxu0 0.0
    %273 = vmatpush1.msra.mxu0 0.0
    %274 = vmatprep.subr.mxu0 0.0
    %275 = vmatpush1.msra.mxu0 0.0
    %276 = vmatprep.subr.mxu0 0.0
    %277 = vmatpush1.msra.mxu0 %v247
    %278 = vmatprep.subr.mxu0 0.0
    %279 = vmatpush1.msra.mxu0 %v246
    %280 = vmatprep.subr.mxu0 0.0
    %281 = vmatpush2.msra.mxu0 0.0
    %282 = vmatprep.subr.mxu0 0.0
    %283 = vmatpush2.msra.mxu0 0.0
    %284 = vmatprep.subr.mxu0 0.0
    %285 = vmatpush2.msra.mxu0 0.0
    %286 = vmatprep.subr.mxu0 0.0
    %287 = vmatpush2.msra.mxu0 0.0
    %288 = vmatprep.subr.mxu0 0.0
    %289 = vmatpush2.msra.mxu0 0.0
    %290 = vmatprep.subr.mxu0 0.0
    %291 = vmatpush2.msra.mxu0 0.0
    %292 = vmatprep.subr.mxu0 0.0
    %293 = vmatpush2.msra.mxu0 0.0
    %294 = vmatprep.subr.mxu0 0.0
    %295 = vmatpush2.msra.mxu0 0.0
    %296 = vmatprep.subr.mxu0 0.0
    %297 = vmatpush2.msra.mxu0 0.0
    %298 = vmatprep.subr.mxu0 0.0
    %299 = vmatpush2.msra.mxu0 0.0
    %300 = vmatprep.subr.mxu0 0.0
    %301 = vmatpush2.msra.mxu0 0.0
    %302 = vmatprep.subr.mxu0 0.0
    %303 = vmatpush2.msra.mxu0 0.0
    %304 = vmatprep.subr.mxu0 0.0
    %305 = vmatpush2.msra.mxu0 0.0
    %306 = vmatprep.subr.mxu0 0.0
    %307 = vmatpush2.msra.mxu0 0.0
    %308 = vmatprep.subr.mxu0 0.0
    %309 = vmatpush2.msra.mxu0 0.0
    %310 = vmatprep.subr.mxu0 0.0
    %311 = vmatpush2.msra.mxu0 0.0
    %312 = vmatprep.mubr.f32.mxu0 0.0
    %313 = vmatmul.mubr.f32.gmra.mxu0 %v160
    %v314 = vpop.f32.mrf.mxu0
    %v315 = vadd.f32 0.0, %v314
    %v316 = vpop.f32.mrf.mxu0
    %317 = vmatprep.mubr.f32.mxu0 0.0
    %318 = vmatmul.mubr.f32.gmra.mxu0 %v163
    %v319 = vpop.f32.mrf.mxu0
    %v320 = vadd.f32 0.0, %v319
    %v321 = vpop.f32.mrf.mxu0
    %322 = vdwg.mxu0
    %v323 = vmul.f32 %v315, %v72
    %v324 = vmul.f32 %v320, %v73
    %v325 = vld [vmem:[%s6] sm:$0x1]
    %v327 = vsel %vm76, %v325, 0
    %v330 = vsel %vm76, %v323, 0
    %v333 = vsel %vm76, %v324, 0
    %335 = vmatprep.subr.mxu0 0.0
    %336 = vmatpush1.xpose.msra.mxu0 0.0
    %337 = vmatprep.subr.mxu0 0.0
    %338 = vmatpush1.xpose.msra.mxu0 0.0
    %339 = vmatprep.subr.mxu0 0.0
    %340 = vmatpush1.xpose.msra.mxu0 0.0
    %341 = vmatprep.subr.mxu0 0.0
    %342 = vmatpush1.xpose.msra.mxu0 0.0
    %343 = vmatprep.subr.mxu0 0.0
    %344 = vmatpush1.xpose.msra.mxu0 0.0
    %345 = vmatprep.subr.mxu0 0.0
    %346 = vmatpush1.xpose.msra.mxu0 0.0
    %347 = vmatprep.subr.mxu0 0.0
    %348 = vmatpush1.xpose.msra.mxu0 0.0
    %349 = vmatprep.subr.mxu0 0.0
    %350 = vmatpush1.xpose.msra.mxu0 0.0
    %351 = vmatprep.subr.mxu0 0.0
    %352 = vmatpush1.xpose.msra.mxu0 0.0
    %353 = vmatprep.subr.mxu0 0.0
    %354 = vmatpush1.xpose.msra.mxu0 0.0
    %355 = vmatprep.subr.mxu0 0.0
    %356 = vmatpush1.xpose.msra.mxu0 0.0
    %357 = vmatprep.subr.mxu0 0.0
    %358 = vmatpush1.xpose.msra.mxu0 0.0
    %359 = vmatprep.subr.mxu0 0.0
    %360 = vmatpush1.xpose.msra.mxu0 0.0
    %361 = vmatprep.subr.mxu0 0.0
    %362 = vmatpush1.xpose.msra.mxu0 0.0
    %363 = vmatprep.subr.mxu0 0.0
    %364 = vmatpush1.xpose.msra.mxu0 %v333
    %365 = vmatprep.subr.mxu0 0.0
    %366 = vmatpush1.xpose.msra.mxu0 %v330
    %367 = vmatprep.subr.mxu0 0.0
    %368 = vmatpush2.xpose.msra.mxu0 0.0
    %369 = vmatprep.subr.mxu0 0.0
    %370 = vmatpush2.xpose.msra.mxu0 0.0
    %371 = vmatprep.subr.mxu0 0.0
    %372 = vmatpush2.xpose.msra.mxu0 0.0
    %373 = vmatprep.subr.mxu0 0.0
    %374 = vmatpush2.xpose.msra.mxu0 0.0
    %375 = vmatprep.subr.mxu0 0.0
    %376 = vmatpush2.xpose.msra.mxu0 0.0
    %377 = vmatprep.subr.mxu0 0.0
    %378 = vmatpush2.xpose.msra.mxu0 0.0
    %379 = vmatprep.subr.mxu0 0.0
    %380 = vmatpush2.xpose.msra.mxu0 0.0
    %381 = vmatprep.subr.mxu0 0.0
    %382 = vmatpush2.xpose.msra.mxu0 0.0
    %383 = vmatprep.subr.mxu0 0.0
    %384 = vmatpush2.xpose.msra.mxu0 0.0
    %385 = vmatprep.subr.mxu0 0.0
    %386 = vmatpush2.xpose.msra.mxu0 0.0
    %387 = vmatprep.subr.mxu0 0.0
    %388 = vmatpush2.xpose.msra.mxu0 0.0
    %389 = vmatprep.subr.mxu0 0.0
    %390 = vmatpush2.xpose.msra.mxu0 0.0
    %391 = vmatprep.subr.mxu0 0.0
    %392 = vmatpush2.xpose.msra.mxu0 0.0
    %393 = vmatprep.subr.mxu0 0.0
    %394 = vmatpush2.xpose.msra.mxu0 0.0
    %395 = vmatprep.subr.mxu0 0.0
    %396 = vmatpush2.xpose.msra.mxu0 0.0
    %397 = vmatprep.subr.mxu0 0.0
    %398 = vmatpush2.xpose.msra.mxu0 0.0
    %399 = vmatprep.mubr.f32.mxu0 0.0
    %400 = vmatmul.mubr.f32.gmra.mxu0 %v327
    %v401 = vpop.f32.mrf.mxu0
    %v402 = vadd.f32 0.0, %v401
    %v403 = vpop.f32.mrf.mxu0
    %404 = vdwg.mxu0
    %v405 = vadd.f32 %v245, %v402
    %vm406 = vcmask 122880
    %407 = vst.msk [vmem:[#allocation9] sm:$0x1] %vm406, %v405
    // Predicated region
    $region42: #{tpu_custom_call.1} parent=1 // pred_check
      _
    $region43: #{tpu_custom_call.1} parent=1 // pred_check_branch
      %409 = sbr.rel (0) target = $region45
    $region44: #{tpu_custom_call.1} parent=1 // pred_region
      %s411 = ssub.s32 16, 16
      %412 = vsyncadd [#allocation5], %s411
      %s414 = sshll.u32 [#allocation9], 4
      %s415 = int_to_ptr.vmem [resolvable:$true] %s414
      %417 = dma.vmem_to_hbm [thread:$0]  %s415, 16, %s7, [#allocation5]
    $region45: #{tpu_custom_call.1} parent=1 // pred_fallthru
      _
    // Predicated region
    $region46: #{tpu_custom_call.1} parent=1 // pred_check
      _
    $region47: #{tpu_custom_call.1} parent=1 // pred_check_branch
      %419 = sbr.rel (0) target = $region49
    $region48: #{tpu_custom_call.1} parent=1 // pred_region
      %420 = dma.done [#allocation5], 16
    $region49: #{tpu_custom_call.1} parent=1 // pred_fallthru
      _
    %421 = vsyncpa [#allocation4], 1
    %422 = vsyncpa [#allocation7], 1
    %423 = vsyncpa [#allocation5], 1

</llo_original>
